<compile_context>
chip_gen: v6e
topology: v6e:2x2x1
jax: 0.10.0
libtpu: 0.0.40
codegen_flags: <defaults>
</compile_context>

<pallas_src>
import functools

import jax
import jax.numpy as jnp
from jax.experimental import pallas as pl
from jax.experimental.pallas import tpu as pltpu


def _qfunction_kernel(obs_ref, act_ref,
                      w1o_ref, w1a_ref, b1_ref,
                      w2_ref, b2_ref,
                      w3_ref, b3_ref,
                      out_ref):
    obs = obs_ref[...]
    act = act_ref[...]

    # Layer 1: split-weight matmuls replace concat([obs, act]) @ w1.
    h1 = (jnp.dot(obs, w1o_ref[...], preferred_element_type=jnp.float32)
          + jnp.dot(act, w1a_ref[...], preferred_element_type=jnp.float32)
          + b1_ref[...])
    h1 = jnp.maximum(h1, 0.0).astype(w2_ref.dtype)   # bias/ReLU in f32, feed dot in compute dtype

    # Layer 2.
    h2 = jnp.dot(h1, w2_ref[...], preferred_element_type=jnp.float32) + b2_ref[...]
    h2 = jnp.maximum(h2, 0.0).astype(w3_ref.dtype)

    # Layer 3: (1, H) x (T, H)^T -> (1, T).  Produces the result with batch on
    # the lane axis directly, so the output store is lane-dense.
    q = jax.lax.dot_general(
        w3_ref[...], h2,
        dimension_numbers=(((1,), (1,)), ((), ())),
        preferred_element_type=jnp.float32)
    out_ref[...] = (q + b3_ref[...]).astype(out_ref.dtype)


@functools.partial(jax.jit,
                   static_argnames=("batch_tile", "compute_dtype",
                                    "vmem_limit_bytes"))
def qfunction_forward(obs, action, params, batch_tile=256,
                      compute_dtype=jnp.float32, vmem_limit_bytes=None):
    """Fused Pallas forward of QFunction.trunk on concat([obs, action], dim=1)."""
    w1_obs, w1_act, b1, w2, b2, w3, b3 = params
    B, obs_dim = obs.shape
    Ba, act_dim = action.shape
    assert B == Ba
    hidden = w1_obs.shape[1]

    # Matmul operands in compute_dtype (bf16 on v6e/v7x); biases stay f32.
    obs = obs.astype(compute_dtype)
    action = action.astype(compute_dtype)
    w1_obs = w1_obs.astype(compute_dtype)
    w1_act = w1_act.astype(compute_dtype)
    w2 = w2.astype(compute_dtype)
    w3 = w3.astype(compute_dtype)
    b1 = b1.astype(jnp.float32)
    b2 = b2.astype(jnp.float32)
    b3 = b3.astype(jnp.float32)

    # Pad the batch to a multiple of batch_tile (ragged batches supported).
    B_pad = pl.cdiv(B, batch_tile) * batch_tile
    if B_pad != B:
        obs = jnp.pad(obs, ((0, B_pad - B), (0, 0)))
        action = jnp.pad(action, ((0, B_pad - B), (0, 0)))
    num_tiles = B_pad // batch_tile

    def full_spec(shape):
        return pl.BlockSpec(shape, lambda i: (0, 0))

    out = pl.pallas_call(
        _qfunction_kernel,
        out_shape=jax.ShapeDtypeStruct((1, B_pad), jnp.float32),
        grid_spec=pltpu.PrefetchScalarGridSpec(
            num_scalar_prefetch=0,
            grid=(num_tiles,),
            in_specs=[
                pl.BlockSpec((batch_tile, obs_dim), lambda i: (i, 0)),  # obs tile
                pl.BlockSpec((batch_tile, act_dim), lambda i: (i, 0)),  # action tile
                full_spec((obs_dim, hidden)),                           # w1_obs
                full_spec((act_dim, hidden)),                           # w1_act
                full_spec((1, hidden)),                                 # b1
                full_spec((hidden, hidden)),                            # w2
                full_spec((1, hidden)),                                 # b2
                full_spec((1, hidden)),                                 # w3 (row form)
                full_spec((1, 1)),                                      # b3
            ],
            out_specs=pl.BlockSpec((1, batch_tile), lambda i: (0, i)),
        ),
        compiler_params=pltpu.CompilerParams(
            dimension_semantics=("parallel",),
            vmem_limit_bytes=vmem_limit_bytes),
    )(obs, action, w1_obs, w1_act, b1, w2, b2, w3, b3)

    # Lane-dense (1, B_pad) slab -> (B, 1) column, dropping batch padding.
    return out.reshape(B_pad, 1)[:B]


def init_qfunction_params(key, obs_dim, action_dim, hidden_dim):
    """Deterministic synthetic init matching nn.Linear shapes/scales.

    Weights stored transposed (in, out); w1 pre-split into obs/action halves;
    w3 stored as a (1, hidden) row.
    """
    ks = jax.random.split(key, 7)
    in_dim = obs_dim + action_dim
    s1 = 1.0 / jnp.sqrt(in_dim)
    s2 = 1.0 / jnp.sqrt(hidden_dim)
    w1_obs = jax.random.uniform(ks[0], (obs_dim, hidden_dim), jnp.float32, -s1, s1)
    w1_act = jax.random.uniform(ks[1], (action_dim, hidden_dim), jnp.float32, -s1, s1)
    b1 = jax.random.uniform(ks[2], (1, hidden_dim), jnp.float32, -s1, s1)
    w2 = jax.random.uniform(ks[3], (hidden_dim, hidden_dim), jnp.float32, -s2, s2)
    b2 = jax.random.uniform(ks[4], (1, hidden_dim), jnp.float32, -s2, s2)
    w3 = jax.random.uniform(ks[5], (1, hidden_dim), jnp.float32, -s2, s2)
    b3 = jax.random.uniform(ks[6], (1, 1), jnp.float32, -s2, s2)
    return (w1_obs, w1_act, b1, w2, b2, w3, b3)


def qfunction_reference(obs, action, params):
    """Pure-JAX reference mirroring the PyTorch forward exactly."""
    w1_obs, w1_act, b1, w2, b2, w3, b3 = params
    x = jnp.concatenate([obs, action], axis=1)
    w1 = jnp.concatenate([w1_obs, w1_act], axis=0)
    h1 = jnp.maximum(x @ w1 + b1, 0.0)
    h2 = jnp.maximum(h1 @ w2 + b2, 0.0)
    return h2 @ w3.T + b3


if __name__ == "__main__":
    # Small shapes consistent with the module; batch=200 is deliberately not a
    # multiple of the tile to exercise the padding path and a 2-step grid.
    batch, obs_dim, action_dim, hidden_dim = 200, 16, 8, 32

    key = jax.random.PRNGKey(0)
    k_obs, k_act, k_params = jax.random.split(key, 3)
    obs = jax.random.normal(k_obs, (batch, obs_dim), jnp.float32)
    action = jax.random.normal(k_act, (batch, action_dim), jnp.float32)
    params = init_qfunction_params(k_params, obs_dim, action_dim, hidden_dim)

    q_ref = qfunction_reference(obs, action, params)

    # f32 path: exact vs. reference; batch_tile=128 -> padded B=256, grid=(2,).
    q = qfunction_forward(obs, action, params, batch_tile=128)
    q = jax.block_until_ready(q)
    assert q.shape == (batch, 1)
    assert jnp.allclose(q, q_ref, atol=1e-5, rtol=1e-5), "f32 mismatch vs reference"

    # bf16-operand path (fast MXU path on v6e/v7x); f32 accumulation/bias/ReLU.
    q_bf16 = qfunction_forward(obs, action, params, batch_tile=256,
                               compute_dtype=jnp.bfloat16)
    q_bf16 = jax.block_until_ready(q_bf16)
    assert q_bf16.shape == (batch, 1)
    assert jnp.allclose(q_bf16, q_ref, atol=1e-1, rtol=1e-1), "bf16 path diverged"

    print("KERNEL_OK")
</pallas_src>

<mosaic_0001>
module attributes {stable_mosaic.version = 11 : i64} {
  func.func @_qfunction_kernel(%arg0: i32, %arg1: memref<128x16xf32, #tpu.memory_space<vmem>>, %arg2: memref<128x8xf32, #tpu.memory_space<vmem>>, %arg3: memref<16x32xf32, #tpu.memory_space<vmem>>, %arg4: memref<8x32xf32, #tpu.memory_space<vmem>>, %arg5: memref<1x32xf32, #tpu.memory_space<vmem>>, %arg6: memref<32x32xf32, #tpu.memory_space<vmem>>, %arg7: memref<1x32xf32, #tpu.memory_space<vmem>>, %arg8: memref<1x32xf32, #tpu.memory_space<vmem>>, %arg9: memref<1x1xf32, #tpu.memory_space<vmem>>, %arg10: memref<1x128xf32, #tpu.memory_space<vmem>>) attributes {dimension_semantics = [#tpu.dimension_semantics<parallel>], iteration_bounds = array<i64: 2>, scalar_prefetch = 0 : i64, scratch_operands = 0 : i64, tpu.core_type = #tpu.core_type<tc>, window_params = [{transform_indices = @transform_0, window_bounds = array<i64: 128, 16>}, {transform_indices = @transform_1, window_bounds = array<i64: 128, 8>}, {pipeline_mode = #tpu.pipeline_mode<synchronous>, transform_indices = @transform_2, window_bounds = array<i64: 16, 32>}, {pipeline_mode = #tpu.pipeline_mode<synchronous>, transform_indices = @transform_3, window_bounds = array<i64: 8, 32>}, {pipeline_mode = #tpu.pipeline_mode<synchronous>, transform_indices = @transform_4, window_bounds = array<i64: 1, 32>}, {pipeline_mode = #tpu.pipeline_mode<synchronous>, transform_indices = @transform_5, window_bounds = array<i64: 32, 32>}, {pipeline_mode = #tpu.pipeline_mode<synchronous>, transform_indices = @transform_6, window_bounds = array<i64: 1, 32>}, {pipeline_mode = #tpu.pipeline_mode<synchronous>, transform_indices = @transform_7, window_bounds = array<i64: 1, 32>}, {pipeline_mode = #tpu.pipeline_mode<synchronous>, transform_indices = @transform_8, window_bounds = array<i64: 1, 1>}, {transform_indices = @transform_9, window_bounds = array<i64: 1, 128>}]} {
    %c0 = arith.constant 0 : index
    %c0_0 = arith.constant 0 : index
    %0 = vector.load %arg1[%c0, %c0_0] : memref<128x16xf32, #tpu.memory_space<vmem>>, vector<128x16xf32>
    %c0_1 = arith.constant 0 : index
    %c0_2 = arith.constant 0 : index
    %1 = vector.load %arg2[%c0_1, %c0_2] : memref<128x8xf32, #tpu.memory_space<vmem>>, vector<128x8xf32>
    %c0_3 = arith.constant 0 : index
    %c0_4 = arith.constant 0 : index
    %2 = vector.load %arg3[%c0_3, %c0_4] : memref<16x32xf32, #tpu.memory_space<vmem>>, vector<16x32xf32>
    %cst = arith.constant dense<0.000000e+00> : vector<128x32xf32>
    %3 = tpu.matmul %0, %2, %cst {dimension_numbers = #tpu.dot_dimension_numbers<[1], [0], [0], [1], [0, 0, 1, 1], [], []>} : vector<128x16xf32>, vector<16x32xf32>, vector<128x32xf32> -> vector<128x32xf32>
    %c0_5 = arith.constant 0 : index
    %c0_6 = arith.constant 0 : index
    %4 = vector.load %arg4[%c0_5, %c0_6] : memref<8x32xf32, #tpu.memory_space<vmem>>, vector<8x32xf32>
    %cst_7 = arith.constant dense<0.000000e+00> : vector<128x32xf32>
    %5 = tpu.matmul %1, %4, %cst_7 {dimension_numbers = #tpu.dot_dimension_numbers<[1], [0], [0], [1], [0, 0, 1, 1], [], []>} : vector<128x8xf32>, vector<8x32xf32>, vector<128x32xf32> -> vector<128x32xf32>
    %6 = arith.addf %3, %5 : vector<128x32xf32>
    %c0_8 = arith.constant 0 : index
    %c0_9 = arith.constant 0 : index
    %7 = vector.load %arg5[%c0_8, %c0_9] : memref<1x32xf32, #tpu.memory_space<vmem>>, vector<1x32xf32>
    %8 = vector.broadcast %7 : vector<1x32xf32> to vector<128x32xf32>
    %9 = arith.addf %6, %8 : vector<128x32xf32>
    %cst_10 = arith.constant 0.000000e+00 : f32
    %10 = vector.broadcast %cst_10 : f32 to vector<128x32xf32>
    %11 = arith.maximumf %9, %10 : vector<128x32xf32>
    %c0_11 = arith.constant 0 : index
    %c0_12 = arith.constant 0 : index
    %12 = vector.load %arg6[%c0_11, %c0_12] : memref<32x32xf32, #tpu.memory_space<vmem>>, vector<32x32xf32>
    %cst_13 = arith.constant dense<0.000000e+00> : vector<128x32xf32>
    %13 = tpu.matmul %11, %12, %cst_13 {dimension_numbers = #tpu.dot_dimension_numbers<[1], [0], [0], [1], [0, 0, 1, 1], [], []>} : vector<128x32xf32>, vector<32x32xf32>, vector<128x32xf32> -> vector<128x32xf32>
    %c0_14 = arith.constant 0 : index
    %c0_15 = arith.constant 0 : index
    %14 = vector.load %arg7[%c0_14, %c0_15] : memref<1x32xf32, #tpu.memory_space<vmem>>, vector<1x32xf32>
    %15 = vector.broadcast %14 : vector<1x32xf32> to vector<128x32xf32>
    %16 = arith.addf %13, %15 : vector<128x32xf32>
    %cst_16 = arith.constant 0.000000e+00 : f32
    %17 = vector.broadcast %cst_16 : f32 to vector<128x32xf32>
    %18 = arith.maximumf %16, %17 : vector<128x32xf32>
    %c0_17 = arith.constant 0 : index
    %c0_18 = arith.constant 0 : index
    %19 = vector.load %arg8[%c0_17, %c0_18] : memref<1x32xf32, #tpu.memory_space<vmem>>, vector<1x32xf32>
    %cst_19 = arith.constant dense<0.000000e+00> : vector<1x128xf32>
    %20 = tpu.matmul %19, %18, %cst_19 {dimension_numbers = #tpu.dot_dimension_numbers<[1], [1], [0], [0], [0, 0, 1, 0], [], []>} : vector<1x32xf32>, vector<128x32xf32>, vector<1x128xf32> -> vector<1x128xf32>
    %c0_20 = arith.constant 0 : index
    %c0_21 = arith.constant 0 : index
    %21 = vector.load %arg9[%c0_20, %c0_21] : memref<1x1xf32, #tpu.memory_space<vmem>>, vector<1x1xf32>
    %22 = vector.broadcast %21 : vector<1x1xf32> to vector<1x128xf32>
    %23 = arith.addf %20, %22 : vector<1x128xf32>
    %c0_22 = arith.constant 0 : index
    %c0_23 = arith.constant 0 : index
    %24 = vector.load %arg10[%c0_22, %c0_23] : memref<1x128xf32, #tpu.memory_space<vmem>>, vector<1x128xf32>
    tpu.vector_store %arg10[%c0_22, %c0_23], %23 {strides = array<i32>} : memref<1x128xf32, #tpu.memory_space<vmem>>, vector<1x128xf32>,
    return
  }
  func.func @transform_0(%arg0: i32) -> (i32, i32) {
    %c0_i32 = arith.constant 0 : i32
    %c0_i32_0 = arith.constant 0 : i32
    return %arg0, %c0_i32 : i32, i32
  }
  func.func @transform_1(%arg0: i32) -> (i32, i32) {
    %c0_i32 = arith.constant 0 : i32
    %c0_i32_0 = arith.constant 0 : i32
    return %arg0, %c0_i32 : i32, i32
  }
  func.func @transform_2(%arg0: i32) -> (i32, i32) {
    %c0_i32 = arith.constant 0 : i32
    %c0_i32_0 = arith.constant 0 : i32
    %c0_i32_1 = arith.constant 0 : i32
    return %c0_i32, %c0_i32_0 : i32, i32
  }
  func.func @transform_3(%arg0: i32) -> (i32, i32) {
    %c0_i32 = arith.constant 0 : i32
    %c0_i32_0 = arith.constant 0 : i32
    %c0_i32_1 = arith.constant 0 : i32
    return %c0_i32, %c0_i32_0 : i32, i32
  }
  func.func @transform_4(%arg0: i32) -> (i32, i32) {
    %c0_i32 = arith.constant 0 : i32
    %c0_i32_0 = arith.constant 0 : i32
    %c0_i32_1 = arith.constant 0 : i32
    return %c0_i32, %c0_i32_0 : i32, i32
  }
  func.func @transform_5(%arg0: i32) -> (i32, i32) {
    %c0_i32 = arith.constant 0 : i32
    %c0_i32_0 = arith.constant 0 : i32
    %c0_i32_1 = arith.constant 0 : i32
    return %c0_i32, %c0_i32_0 : i32, i32
  }
  func.func @transform_6(%arg0: i32) -> (i32, i32) {
    %c0_i32 = arith.constant 0 : i32
    %c0_i32_0 = arith.constant 0 : i32
    %c0_i32_1 = arith.constant 0 : i32
    return %c0_i32, %c0_i32_0 : i32, i32
  }
  func.func @transform_7(%arg0: i32) -> (i32, i32) {
    %c0_i32 = arith.constant 0 : i32
    %c0_i32_0 = arith.constant 0 : i32
    %c0_i32_1 = arith.constant 0 : i32
    return %c0_i32, %c0_i32_0 : i32, i32
  }
  func.func @transform_8(%arg0: i32) -> (i32, i32) {
    %c0_i32 = arith.constant 0 : i32
    %c0_i32_0 = arith.constant 0 : i32
    %c0_i32_1 = arith.constant 0 : i32
    return %c0_i32, %c0_i32_0 : i32, i32
  }
  func.func @transform_9(%arg0: i32) -> (i32, i32) {
    %c0_i32 = arith.constant 0 : i32
    %c0_i32_0 = arith.constant 0 : i32
    return %c0_i32, %arg0 : i32, i32
  }
}

</mosaic_0001>

<llo_original>
// kernel: qfunction_forward.1
$region0: #{qfunction_forward.1}
  #allocation0 [shape = 'u32[]', space=smem, size = 0x4, offset = 0x4, fixed_abs, tag = 'smem constant byte address 0x4 - core index']
  #allocation1 [shape = 'u32[144,128]{1,0:T(1,128)}', space=vmem, size = 0x12000, scoped, tag = 'internal scratch']
  #allocation2 [shape = 'f32[1,1]{1,0:T(1,128)S(1)}', space=vmem, size = 0x200, scoped, tag = 'scoped memory for qfunction_forward.1']
  %s0 = inlined_call_operand.vmem [shape: f32[256,16], index: 0, kind: input, shape index: {}]
  %s1 = inlined_call_operand.vmem [shape: f32[256,8], index: 1, kind: input, shape index: {}]
  %s2 = inlined_call_operand.vmem [shape: f32[16,32], index: 2, kind: input, shape index: {}]
  %s3 = inlined_call_operand.vmem [shape: f32[8,32], index: 3, kind: input, shape index: {}]
  %s4 = inlined_call_operand.vmem [shape: f32[1,32], index: 4, kind: input, shape index: {}]
  %s5 = inlined_call_operand.vmem [shape: f32[32,32], index: 5, kind: input, shape index: {}]
  %s6 = inlined_call_operand.vmem [shape: f32[1,32], index: 6, kind: input, shape index: {}]
  %s7 = inlined_call_operand.vmem [shape: f32[1,32], index: 7, kind: input, shape index: {}]
  %s8 = inlined_call_operand.<no memory space> [shape: f32[1,1], index: 8, kind: input, shape index: {}]
  %s9 = inlined_call_operand.vmem [shape: f32[1,256], index: 9, kind: output, shape index: {}]
  %s10 = sld [smem:[#allocation0]]
  $region69: #{qfunction_forward.1} parent=0
    _
  %s12 = ssub.s32 1, %s10
  %s13 = scalar_select 0, %s12, %s10
  %v14 = vstv %s8
  %15 = vst [vmem:[#allocation2] sm:$0x1] %v14
  loop: start=0, step=1, limit=4
  $region2: #{qfunction_forward.1} parent=0 // loop_pre_header
    _
  $region3: #{qfunction_forward.1} parent=0 // loop_header
    %s17 = sphi 0, %s21
    %p18 = scmp.ge.s32.totalorder %s17, 4
    %s27 = sphi 0, %s29
    %s30 = sphi 0, %s27
    %s31 = sphi 0, %s30
    %s47 = sphi 0, %s31
    %s53 = sphi 0, %s55
    %s56 = sphi 0, %s53
    %s57 = sphi 0, %s56
    %s73 = sphi 0, %s57
    %s77 = sphi 0, %s77
    %s79 = sphi 0, %s77
    %s80 = sphi 0, %s79
    %s94 = sphi 0, %s80
    %s98 = sphi 0, %s98
    %s100 = sphi 0, %s98
    %s101 = sphi 0, %s100
    %s115 = sphi 0, %s101
    %s119 = sphi 0, %s119
    %s121 = sphi 0, %s119
    %s122 = sphi 0, %s121
    %s136 = sphi 0, %s122
    %s140 = sphi 0, %s140
    %s142 = sphi 0, %s140
    %s143 = sphi 0, %s142
    %s157 = sphi 0, %s143
    %s161 = sphi 0, %s161
    %s163 = sphi 0, %s161
    %s164 = sphi 0, %s163
    %s178 = sphi 0, %s164
    %s182 = sphi 0, %s182
    %s184 = sphi 0, %s182
    %s185 = sphi 0, %s184
    %s199 = sphi 0, %s185
    %s203 = sphi 0, %s203
    %s205 = sphi 0, %s203
    %s206 = sphi 0, %s205
    %s220 = sphi 0, %s206
    %s226 = sphi 0, %s228
    %s229 = sphi 0, %s226
    %s230 = sphi 0, %s229
    %s246 = sphi 0, %s230
  $region4: #{qfunction_forward.1} parent=0 // loop_header_branch
    %20 = sbr.rel (%p18) target = $region8
  $region5: #{qfunction_forward.1} parent=0 // loop_body
    %s22 = ssub.s32 %s17, 1
    %s23 = ssub.s32 %s17, 2
    %s24 = sadd.s32 %s17, 1
    %s25 = ssub.s32 %s17, %s24
    %p26 = scmp.eq.s32.totalorder %s25, 0
    %s28 = sadd.s32 %s27, 1
    %s29 = scalar_select %p26, %s27, %s28
    %p32 = pneg %p26
    %p33 = scmp.eq.s32.totalorder %s17, 1
    %p34 = por %p32, %p33
    %p35 = scmp.ne.s32.totalorder %s27, %s30
    %p36 = scmp.eq.s32.totalorder %s17, 0
    %p37 = por %p35, %p36
    %p38 = scmp.ne.s32.totalorder %s27, %s30
    %p39 = scmp.eq.s32.totalorder %s22, 1
    %p40 = por %p38, %p39
    %p41 = scmp.ne.s32.totalorder %s30, %s31
    %p42 = scmp.eq.s32.totalorder %s22, 0
    %p43 = por %p41, %p42
    %p44 = scmp.ne.s32.totalorder %s30, %s31
    %p45 = scmp.eq.s32.totalorder %s23, 1
    %p46 = por %p44, %p45
    %p48 = scmp.ne.s32.totalorder %s31, %s47
    %p49 = scmp.eq.s32.totalorder %s23, 0
    %p50 = por %p48, %p49
    %s51 = ssub.s32 %s17, %s24
    %p52 = scmp.eq.s32.totalorder %s51, 0
    %s54 = sadd.s32 %s53, 1
    %s55 = scalar_select %p52, %s53, %s54
    %p58 = pneg %p52
    %p59 = scmp.eq.s32.totalorder %s17, 1
    %p60 = por %p58, %p59
    %p61 = scmp.ne.s32.totalorder %s53, %s56
    %p62 = scmp.eq.s32.totalorder %s17, 0
    %p63 = por %p61, %p62
    %p64 = scmp.ne.s32.totalorder %s53, %s56
    %p65 = scmp.eq.s32.totalorder %s22, 1
    %p66 = por %p64, %p65
    %p67 = scmp.ne.s32.totalorder %s56, %s57
    %p68 = scmp.eq.s32.totalorder %s22, 0
    %p69 = por %p67, %p68
    %p70 = scmp.ne.s32.totalorder %s56, %s57
    %p71 = scmp.eq.s32.totalorder %s23, 1
    %p72 = por %p70, %p71
    %p74 = scmp.ne.s32.totalorder %s57, %s73
    %p75 = scmp.eq.s32.totalorder %s23, 0
    %p76 = por %p74, %p75
    %s78 = sadd.s32 %s77, 1
    %p81 = scmp.eq.s32.totalorder %s17, 1
    %p82 = scmp.ne.s32.totalorder %s77, %s79
    %p83 = scmp.eq.s32.totalorder %s17, 0
    %p84 = por %p82, %p83
    %p85 = scmp.ne.s32.totalorder %s77, %s79
    %p86 = scmp.eq.s32.totalorder %s22, 1
    %p87 = por %p85, %p86
    %p88 = scmp.ne.s32.totalorder %s79, %s80
    %p89 = scmp.eq.s32.totalorder %s22, 0
    %p90 = por %p88, %p89
    %p91 = scmp.ne.s32.totalorder %s79, %s80
    %p92 = scmp.eq.s32.totalorder %s23, 1
    %p93 = por %p91, %p92
    %p95 = scmp.ne.s32.totalorder %s80, %s94
    %p96 = scmp.eq.s32.totalorder %s23, 0
    %p97 = por %p95, %p96
    %s99 = sadd.s32 %s98, 1
    %p102 = scmp.eq.s32.totalorder %s17, 1
    %p103 = scmp.ne.s32.totalorder %s98, %s100
    %p104 = scmp.eq.s32.totalorder %s17, 0
    %p105 = por %p103, %p104
    %p106 = scmp.ne.s32.totalorder %s98, %s100
    %p107 = scmp.eq.s32.totalorder %s22, 1
    %p108 = por %p106, %p107
    %p109 = scmp.ne.s32.totalorder %s100, %s101
    %p110 = scmp.eq.s32.totalorder %s22, 0
    %p111 = por %p109, %p110
    %p112 = scmp.ne.s32.totalorder %s100, %s101
    %p113 = scmp.eq.s32.totalorder %s23, 1
    %p114 = por %p112, %p113
    %p116 = scmp.ne.s32.totalorder %s101, %s115
    %p117 = scmp.eq.s32.totalorder %s23, 0
    %p118 = por %p116, %p117
    %s120 = sadd.s32 %s119, 1
    %p123 = scmp.eq.s32.totalorder %s17, 1
    %p124 = scmp.ne.s32.totalorder %s119, %s121
    %p125 = scmp.eq.s32.totalorder %s17, 0
    %p126 = por %p124, %p125
    %p127 = scmp.ne.s32.totalorder %s119, %s121
    %p128 = scmp.eq.s32.totalorder %s22, 1
    %p129 = por %p127, %p128
    %p130 = scmp.ne.s32.totalorder %s121, %s122
    %p131 = scmp.eq.s32.totalorder %s22, 0
    %p132 = por %p130, %p131
    %p133 = scmp.ne.s32.totalorder %s121, %s122
    %p134 = scmp.eq.s32.totalorder %s23, 1
    %p135 = por %p133, %p134
    %p137 = scmp.ne.s32.totalorder %s122, %s136
    %p138 = scmp.eq.s32.totalorder %s23, 0
    %p139 = por %p137, %p138
    %s141 = sadd.s32 %s140, 1
    %p144 = scmp.eq.s32.totalorder %s17, 1
    %p145 = scmp.ne.s32.totalorder %s140, %s142
    %p146 = scmp.eq.s32.totalorder %s17, 0
    %p147 = por %p145, %p146
    %p148 = scmp.ne.s32.totalorder %s140, %s142
    %p149 = scmp.eq.s32.totalorder %s22, 1
    %p150 = por %p148, %p149
    %p151 = scmp.ne.s32.totalorder %s142, %s143
    %p152 = scmp.eq.s32.totalorder %s22, 0
    %p153 = por %p151, %p152
    %p154 = scmp.ne.s32.totalorder %s142, %s143
    %p155 = scmp.eq.s32.totalorder %s23, 1
    %p156 = por %p154, %p155
    %p158 = scmp.ne.s32.totalorder %s143, %s157
    %p159 = scmp.eq.s32.totalorder %s23, 0
    %p160 = por %p158, %p159
    %s162 = sadd.s32 %s161, 1
    %p165 = scmp.eq.s32.totalorder %s17, 1
    %p166 = scmp.ne.s32.totalorder %s161, %s163
    %p167 = scmp.eq.s32.totalorder %s17, 0
    %p168 = por %p166, %p167
    %p169 = scmp.ne.s32.totalorder %s161, %s163
    %p170 = scmp.eq.s32.totalorder %s22, 1
    %p171 = por %p169, %p170
    %p172 = scmp.ne.s32.totalorder %s163, %s164
    %p173 = scmp.eq.s32.totalorder %s22, 0
    %p174 = por %p172, %p173
    %p175 = scmp.ne.s32.totalorder %s163, %s164
    %p176 = scmp.eq.s32.totalorder %s23, 1
    %p177 = por %p175, %p176
    %p179 = scmp.ne.s32.totalorder %s164, %s178
    %p180 = scmp.eq.s32.totalorder %s23, 0
    %p181 = por %p179, %p180
    %s183 = sadd.s32 %s182, 1
    %p186 = scmp.eq.s32.totalorder %s17, 1
    %p187 = scmp.ne.s32.totalorder %s182, %s184
    %p188 = scmp.eq.s32.totalorder %s17, 0
    %p189 = por %p187, %p188
    %p190 = scmp.ne.s32.totalorder %s182, %s184
    %p191 = scmp.eq.s32.totalorder %s22, 1
    %p192 = por %p190, %p191
    %p193 = scmp.ne.s32.totalorder %s184, %s185
    %p194 = scmp.eq.s32.totalorder %s22, 0
    %p195 = por %p193, %p194
    %p196 = scmp.ne.s32.totalorder %s184, %s185
    %p197 = scmp.eq.s32.totalorder %s23, 1
    %p198 = por %p196, %p197
    %p200 = scmp.ne.s32.totalorder %s185, %s199
    %p201 = scmp.eq.s32.totalorder %s23, 0
    %p202 = por %p200, %p201
    %s204 = sadd.s32 %s203, 1
    %p207 = scmp.eq.s32.totalorder %s17, 1
    %p208 = scmp.ne.s32.totalorder %s203, %s205
    %p209 = scmp.eq.s32.totalorder %s17, 0
    %p210 = por %p208, %p209
    %p211 = scmp.ne.s32.totalorder %s203, %s205
    %p212 = scmp.eq.s32.totalorder %s22, 1
    %p213 = por %p211, %p212
    %p214 = scmp.ne.s32.totalorder %s205, %s206
    %p215 = scmp.eq.s32.totalorder %s22, 0
    %p216 = por %p214, %p215
    %p217 = scmp.ne.s32.totalorder %s205, %s206
    %p218 = scmp.eq.s32.totalorder %s23, 1
    %p219 = por %p217, %p218
    %p221 = scmp.ne.s32.totalorder %s206, %s220
    %p222 = scmp.eq.s32.totalorder %s23, 0
    %p223 = por %p221, %p222
    %s224 = ssub.s32 %s17, %s24
    %p225 = scmp.eq.s32.totalorder %s224, 0
    %s227 = sadd.s32 %s226, 1
    %s228 = scalar_select %p225, %s226, %s227
    %p231 = pneg %p225
    %p232 = scmp.eq.s32.totalorder %s17, 1
    %p233 = por %p231, %p232
    %p234 = scmp.ne.s32.totalorder %s226, %s229
    %p235 = scmp.eq.s32.totalorder %s17, 0
    %p236 = por %p234, %p235
    %p237 = scmp.ne.s32.totalorder %s226, %s229
    %p238 = scmp.eq.s32.totalorder %s22, 1
    %p239 = por %p237, %p238
    %p240 = scmp.ne.s32.totalorder %s229, %s230
    %p241 = scmp.eq.s32.totalorder %s22, 0
    %p242 = por %p240, %p241
    %p243 = scmp.ne.s32.totalorder %s229, %s230
    %p244 = scmp.eq.s32.totalorder %s23, 1
    %p245 = por %p243, %p244
    %p247 = scmp.ne.s32.totalorder %s230, %s246
    %p248 = scmp.eq.s32.totalorder %s23, 0
    %p249 = por %p247, %p248
    %p250 = scmp.le.s32.totalorder 1, %s17
    %p251 = scmp.lt.s32.totalorder %s17, 3
    %p252 = pnand %p250, %p251
    %p253 = pneg %p252
    // Predicated region
    $region9: #{qfunction_forward.1} parent=5 // pred_check
      _
    $region10: #{qfunction_forward.1} parent=5 // pred_check_branch
      %255 = sbr.rel (%p252) target = $region12
    $region11: #{qfunction_forward.1} parent=5 // pred_region
      %s256 = ssub.s32 %s17, 1
      // Predicated region
      $region13: #{qfunction_forward.1} parent=11 // pred_check
        %p257 = pneg %p90
      $region14: #{qfunction_forward.1} parent=11 // pred_check_branch
        %259 = sbr.rel (%p257) target = $region16
      $region15: #{qfunction_forward.1} parent=11 // pred_region
        _
      $region16: #{qfunction_forward.1} parent=11 // pred_fallthru
        _
      // Predicated region
      $region17: #{qfunction_forward.1} parent=11 // pred_check
        %p260 = pneg %p111
      $region18: #{qfunction_forward.1} parent=11 // pred_check_branch
        %262 = sbr.rel (%p260) target = $region20
      $region19: #{qfunction_forward.1} parent=11 // pred_region
        _
      $region20: #{qfunction_forward.1} parent=11 // pred_fallthru
        _
      // Predicated region
      $region21: #{qfunction_forward.1} parent=11 // pred_check
        %p263 = pneg %p132
      $region22: #{qfunction_forward.1} parent=11 // pred_check_branch
        %265 = sbr.rel (%p263) target = $region24
      $region23: #{qfunction_forward.1} parent=11 // pred_region
        _
      $region24: #{qfunction_forward.1} parent=11 // pred_fallthru
        _
      // Predicated region
      $region25: #{qfunction_forward.1} parent=11 // pred_check
        %p266 = pneg %p153
      $region26: #{qfunction_forward.1} parent=11 // pred_check_branch
        %268 = sbr.rel (%p266) target = $region28
      $region27: #{qfunction_forward.1} parent=11 // pred_region
        _
      $region28: #{qfunction_forward.1} parent=11 // pred_fallthru
        _
      // Predicated region
      $region29: #{qfunction_forward.1} parent=11 // pred_check
        %p269 = pneg %p174
      $region30: #{qfunction_forward.1} parent=11 // pred_check_branch
        %271 = sbr.rel (%p269) target = $region32
      $region31: #{qfunction_forward.1} parent=11 // pred_region
        _
      $region32: #{qfunction_forward.1} parent=11 // pred_fallthru
        _
      // Predicated region
      $region33: #{qfunction_forward.1} parent=11 // pred_check
        %p272 = pneg %p195
      $region34: #{qfunction_forward.1} parent=11 // pred_check_branch
        %274 = sbr.rel (%p272) target = $region36
      $region35: #{qfunction_forward.1} parent=11 // pred_region
        _
      $region36: #{qfunction_forward.1} parent=11 // pred_fallthru
        _
      // Predicated region
      $region37: #{qfunction_forward.1} parent=11 // pred_check
        %p275 = pneg %p216
      $region38: #{qfunction_forward.1} parent=11 // pred_check_branch
        %277 = sbr.rel (%p275) target = $region40
      $region39: #{qfunction_forward.1} parent=11 // pred_region
        _
      $region40: #{qfunction_forward.1} parent=11 // pred_fallthru
        _
    $region12: #{qfunction_forward.1} parent=5 // pred_fallthru
      _
    %p278 = scmp.lt.s32.totalorder %s17, 2
    // Predicated region
    $region41: #{qfunction_forward.1} parent=5 // pred_check
      %p279 = pneg %p278
    $region42: #{qfunction_forward.1} parent=5 // pred_check_branch
      %281 = sbr.rel (%p279) target = $region44
    $region43: #{qfunction_forward.1} parent=5 // pred_region
      // Predicated region
      $region45: #{qfunction_forward.1} parent=43 // pred_check
        %p282 = pneg %p37
      $region46: #{qfunction_forward.1} parent=43 // pred_check_branch
        %284 = sbr.rel (%p282) target = $region48
      $region47: #{qfunction_forward.1} parent=43 // pred_region
        %s285 = smul.u32 16, %s17
        %p286 = scmp.lt.s32.totalorder %s285, 31
        %s287 = scalar_select %p286, %s285, 31
        %s288 = smul.addr %s287, 8
        %s289 = scalar_lea.vmem %s0, %s288
        %s290 = smul.u32 16, %s17
      $region48: #{qfunction_forward.1} parent=43 // pred_fallthru
        _
      // Predicated region
      $region49: #{qfunction_forward.1} parent=43 // pred_check
        %p291 = pneg %p63
      $region50: #{qfunction_forward.1} parent=43 // pred_check_branch
        %293 = sbr.rel (%p291) target = $region52
      $region51: #{qfunction_forward.1} parent=43 // pred_region
        %s294 = smul.u32 16, %s17
        %p295 = scmp.lt.s32.totalorder %s294, 31
        %s296 = scalar_select %p295, %s294, 31
        %s297 = smul.addr %s296, 8
        %s298 = scalar_lea.vmem %s1, %s297
        %s299 = smul.u32 16, %s17
      $region52: #{qfunction_forward.1} parent=43 // pred_fallthru
        _
    $region44: #{qfunction_forward.1} parent=5 // pred_fallthru
      _
    %p300 = scmp.le.s32.totalorder 1, %s17
    %p301 = scmp.lt.s32.totalorder %s17, 3
    %p302 = pnand %p300, %p301
    %p303 = pneg %p302
    // Predicated region
    $region53: #{qfunction_forward.1} parent=5 // pred_check
      _
    $region54: #{qfunction_forward.1} parent=5 // pred_check_branch
      %305 = sbr.rel (%p302) target = $region56
    $region55: #{qfunction_forward.1} parent=5 // pred_region
      %s306 = ssub.s32 %s17, 1
      %s307 = smul.u32 16, %s22
      %p308 = scmp.lt.s32.totalorder %s307, 31
      %s309 = scalar_select %p308, %s307, 31
      %s310 = smul.addr %s309, 8
      %s311 = scalar_lea.vmem %s0, %s310
      %p312 = pneg %p43
      %p313 = pneg %p40
      %s314 = smul.u32 16, %s22
      %p315 = scmp.lt.s32.totalorder %s314, 31
      %s316 = scalar_select %p315, %s314, 31
      %s317 = smul.addr %s316, 8
      %s318 = scalar_lea.vmem %s1, %s317
      %p319 = pneg %p69
      %p320 = pneg %p66
      %p321 = pneg %p90
      %p322 = pneg %p87
      %p323 = pneg %p111
      %p324 = pneg %p108
      %p325 = pneg %p132
      %p326 = pneg %p129
      %p327 = pneg %p153
      %p328 = pneg %p150
      %p329 = pneg %p174
      %p330 = pneg %p171
      %p331 = pneg %p195
      %p332 = pneg %p192
      %p333 = pneg %p216
      %p334 = pneg %p213
      %p335 = pneg %p242
      %p336 = pneg %p239
      %p337 = scmp.lt.s32.totalorder %s22, 1
      %s338 = scalar_select %p337, %s22, 1
      %s339 = scalar_lea.vmem %s9, %s338
      %s340 = smul.u32 16, %s22
      %p341 = scmp.lt.s32.totalorder %s340, 31
      %s342 = scalar_select %p341, %s340, 31
      %s343 = smul.addr %s342, 8
      %s344 = scalar_lea.vmem %s0, %s343
      %s345 = smul.u32 16, %s22
      %s346 = smul.u32 16, %s22
      %p347 = scmp.lt.s32.totalorder %s346, 31
      %s348 = scalar_select %p347, %s346, 31
      %s349 = smul.addr %s348, 8
      %s350 = scalar_lea.vmem %s1, %s349
      %s351 = smul.u32 16, %s22
      %p352 = scmp.lt.s32.totalorder %s22, 1
      %s353 = scalar_select %p352, %s22, 1
      %s354 = scalar_lea.vmem %s9, %s353
      %v355 = vld [vmem:[%s344] sm:$0xff]
      %v356 = vld [vmem:[%s344 + $0x8] sm:$0xff]
      %v357 = vld [vmem:[%s344 + $0x10] sm:$0xff]
      %v358 = vld [vmem:[%s344 + $0x18] sm:$0xff]
      %v359 = vld [vmem:[%s344 + $0x20] sm:$0xff]
      %v360 = vld [vmem:[%s344 + $0x28] sm:$0xff]
      %v361 = vld [vmem:[%s344 + $0x30] sm:$0xff]
      %v362 = vld [vmem:[%s344 + $0x38] sm:$0xff]
      %v363 = vld [vmem:[%s344 + $0x40] sm:$0xff]
      %v364 = vld [vmem:[%s344 + $0x48] sm:$0xff]
      %v365 = vld [vmem:[%s344 + $0x50] sm:$0xff]
      %v366 = vld [vmem:[%s344 + $0x58] sm:$0xff]
      %v367 = vld [vmem:[%s344 + $0x60] sm:$0xff]
      %v368 = vld [vmem:[%s344 + $0x68] sm:$0xff]
      %v369 = vld [vmem:[%s344 + $0x70] sm:$0xff]
      %v370 = vld [vmem:[%s344 + $0x78] sm:$0xff]
      %v371 = vld [vmem:[%s350] sm:$0xff]
      %v372 = vld [vmem:[%s350 + $0x8] sm:$0xff]
      %v373 = vld [vmem:[%s350 + $0x10] sm:$0xff]
      %v374 = vld [vmem:[%s350 + $0x18] sm:$0xff]
      %v375 = vld [vmem:[%s350 + $0x20] sm:$0xff]
      %v376 = vld [vmem:[%s350 + $0x28] sm:$0xff]
      %v377 = vld [vmem:[%s350 + $0x30] sm:$0xff]
      %v378 = vld [vmem:[%s350 + $0x38] sm:$0xff]
      %v379 = vld [vmem:[%s350 + $0x40] sm:$0xff]
      %v380 = vld [vmem:[%s350 + $0x48] sm:$0xff]
      %v381 = vld [vmem:[%s350 + $0x50] sm:$0xff]
      %v382 = vld [vmem:[%s350 + $0x58] sm:$0xff]
      %v383 = vld [vmem:[%s350 + $0x60] sm:$0xff]
      %v384 = vld [vmem:[%s350 + $0x68] sm:$0xff]
      %v385 = vld [vmem:[%s350 + $0x70] sm:$0xff]
      %v386 = vld [vmem:[%s350 + $0x78] sm:$0xff]
      %v387 = vld [vmem:[%s2] sm:$0xff]
      %v388 = vld [vmem:[%s2 + $0x8] sm:$0xff]
      %v389 = vld [vmem:[%s3] sm:$0xff]
      %vm390 = vcmask 64512
      %v392 = vsel %vm390, %v371, 0
      %v395 = vsel %vm390, %v372, 0
      %v398 = vsel %vm390, %v373, 0
      %v401 = vsel %vm390, %v374, 0
      %v404 = vsel %vm390, %v375, 0
      %v407 = vsel %vm390, %v376, 0
      %v410 = vsel %vm390, %v377, 0
      %v413 = vsel %vm390, %v378, 0
      %v416 = vsel %vm390, %v379, 0
      %v419 = vsel %vm390, %v380, 0
      %v422 = vsel %vm390, %v381, 0
      %v425 = vsel %vm390, %v382, 0
      %v428 = vsel %vm390, %v383, 0
      %v431 = vsel %vm390, %v384, 0
      %v434 = vsel %vm390, %v385, 0
      %v437 = vsel %vm390, %v386, 0
      %439 = vmatprep.subr.mxu0 0.0
      %440 = vmatpush1.msra.mxu0 0.0
      %441 = vmatprep.subr.mxu0 0.0
      %442 = vmatpush1.msra.mxu0 0.0
      %443 = vmatprep.subr.mxu0 0.0
      %444 = vmatpush1.msra.mxu0 0.0
      %445 = vmatprep.subr.mxu0 0.0
      %446 = vmatpush1.msra.mxu0 0.0
      %447 = vmatprep.subr.mxu0 0.0
      %448 = vmatpush1.msra.mxu0 0.0
      %449 = vmatprep.subr.mxu0 0.0
      %450 = vmatpush1.msra.mxu0 0.0
      %451 = vmatprep.subr.mxu0 0.0
      %452 = vmatpush1.msra.mxu0 0.0
      %453 = vmatprep.subr.mxu0 0.0
      %454 = vmatpush1.msra.mxu0 0.0
      %455 = vmatprep.subr.mxu0 0.0
      %456 = vmatpush1.msra.mxu0 0.0
      %457 = vmatprep.subr.mxu0 0.0
      %458 = vmatpush1.msra.mxu0 0.0
      %459 = vmatprep.subr.mxu0 0.0
      %460 = vmatpush1.msra.mxu0 0.0
      %461 = vmatprep.subr.mxu0 0.0
      %462 = vmatpush1.msra.mxu0 0.0
      %463 = vmatprep.subr.mxu0 0.0
      %464 = vmatpush1.msra.mxu0 0.0
      %465 = vmatprep.subr.mxu0 0.0
      %466 = vmatpush1.msra.mxu0 0.0
      %467 = vmatprep.subr.mxu0 0.0
      %468 = vmatpush1.msra.mxu0 0.0
      %469 = vmatprep.subr.mxu0 0.0
      %470 = vmatpush1.msra.mxu0 %v389
      %471 = vmatprep.subr.mxu0 0.0
      %472 = vmatpush2.msra.mxu0 0.0
      %473 = vmatprep.subr.mxu0 0.0
      %474 = vmatpush2.msra.mxu0 0.0
      %475 = vmatprep.subr.mxu0 0.0
      %476 = vmatpush2.msra.mxu0 0.0
      %477 = vmatprep.subr.mxu0 0.0
      %478 = vmatpush2.msra.mxu0 0.0
      %479 = vmatprep.subr.mxu0 0.0
      %480 = vmatpush2.msra.mxu0 0.0
      %481 = vmatprep.subr.mxu0 0.0
      %482 = vmatpush2.msra.mxu0 0.0
      %483 = vmatprep.subr.mxu0 0.0
      %484 = vmatpush2.msra.mxu0 0.0
      %485 = vmatprep.subr.mxu0 0.0
      %486 = vmatpush2.msra.mxu0 0.0
      %487 = vmatprep.subr.mxu0 0.0
      %488 = vmatpush2.msra.mxu0 0.0
      %489 = vmatprep.subr.mxu0 0.0
      %490 = vmatpush2.msra.mxu0 0.0
      %491 = vmatprep.subr.mxu0 0.0
      %492 = vmatpush2.msra.mxu0 0.0
      %493 = vmatprep.subr.mxu0 0.0
      %494 = vmatpush2.msra.mxu0 0.0
      %495 = vmatprep.subr.mxu0 0.0
      %496 = vmatpush2.msra.mxu0 0.0
      %497 = vmatprep.subr.mxu0 0.0
      %498 = vmatpush2.msra.mxu0 0.0
      %499 = vmatprep.subr.mxu0 0.0
      %500 = vmatpush2.msra.mxu0 0.0
      %501 = vmatprep.subr.mxu0 0.0
      %502 = vmatpush2.msra.mxu0 0.0
      %503 = vmatprep.mubr.f32.mxu0 0.0
      %504 = vmatmul.mubr.f32.gmra.mxu0 %v392
      %v505 = vpop.f32.mrf.mxu0
      %v506 = vadd.f32 0.0, %v505
      %v507 = vpop.f32.mrf.mxu0
      %508 = vmatprep.mubr.f32.mxu0 0.0
      %509 = vmatmul.mubr.f32.gmra.mxu0 %v395
      %v510 = vpop.f32.mrf.mxu0
      %v511 = vadd.f32 0.0, %v510
      %v512 = vpop.f32.mrf.mxu0
      %513 = vmatprep.mubr.f32.mxu0 0.0
      %514 = vmatmul.mubr.f32.gmra.mxu0 %v398
      %v515 = vpop.f32.mrf.mxu0
      %v516 = vadd.f32 0.0, %v515
      %v517 = vpop.f32.mrf.mxu0
      %518 = vmatprep.mubr.f32.mxu0 0.0
      %519 = vmatmul.mubr.f32.gmra.mxu0 %v401
      %v520 = vpop.f32.mrf.mxu0
      %v521 = vadd.f32 0.0, %v520
      %v522 = vpop.f32.mrf.mxu0
      %523 = vmatprep.mubr.f32.mxu0 0.0
      %524 = vmatmul.mubr.f32.gmra.mxu0 %v404
      %v525 = vpop.f32.mrf.mxu0
      %v526 = vadd.f32 0.0, %v525
      %v527 = vpop.f32.mrf.mxu0
      %528 = vmatprep.mubr.f32.mxu0 0.0
      %529 = vmatmul.mubr.f32.gmra.mxu0 %v407
      %v530 = vpop.f32.mrf.mxu0
      %v531 = vadd.f32 0.0, %v530
      %v532 = vpop.f32.mrf.mxu0
      %533 = vmatprep.mubr.f32.mxu0 0.0
      %534 = vmatmul.mubr.f32.gmra.mxu0 %v410
      %v535 = vpop.f32.mrf.mxu0
      %v536 = vadd.f32 0.0, %v535
      %v537 = vpop.f32.mrf.mxu0
      %538 = vmatprep.mubr.f32.mxu0 0.0
      %539 = vmatmul.mubr.f32.gmra.mxu0 %v413
      %v540 = vpop.f32.mrf.mxu0
      %v541 = vadd.f32 0.0, %v540
      %v542 = vpop.f32.mrf.mxu0
      %543 = vmatprep.mubr.f32.mxu0 0.0
      %544 = vmatmul.mubr.f32.gmra.mxu0 %v416
      %v545 = vpop.f32.mrf.mxu0
      %v546 = vadd.f32 0.0, %v545
      %v547 = vpop.f32.mrf.mxu0
      %548 = vmatprep.mubr.f32.mxu0 0.0
      %549 = vmatmul.mubr.f32.gmra.mxu0 %v419
      %v550 = vpop.f32.mrf.mxu0
      %v551 = vadd.f32 0.0, %v550
      %v552 = vpop.f32.mrf.mxu0
      %553 = vmatprep.mubr.f32.mxu0 0.0
      %554 = vmatmul.mubr.f32.gmra.mxu0 %v422
      %v555 = vpop.f32.mrf.mxu0
      %v556 = vadd.f32 0.0, %v555
      %v557 = vpop.f32.mrf.mxu0
      %558 = vmatprep.mubr.f32.mxu0 0.0
      %559 = vmatmul.mubr.f32.gmra.mxu0 %v425
      %v560 = vpop.f32.mrf.mxu0
      %v561 = vadd.f32 0.0, %v560
      %v562 = vpop.f32.mrf.mxu0
      %563 = vmatprep.mubr.f32.mxu0 0.0
      %564 = vmatmul.mubr.f32.gmra.mxu0 %v428
      %v565 = vpop.f32.mrf.mxu0
      %v566 = vadd.f32 0.0, %v565
      %v567 = vpop.f32.mrf.mxu0
      %568 = vmatprep.mubr.f32.mxu0 0.0
      %569 = vmatmul.mubr.f32.gmra.mxu0 %v431
      %v570 = vpop.f32.mrf.mxu0
      %v571 = vadd.f32 0.0, %v570
      %v572 = vpop.f32.mrf.mxu0
      %573 = vmatprep.mubr.f32.mxu0 0.0
      %574 = vmatmul.mubr.f32.gmra.mxu0 %v434
      %v575 = vpop.f32.mrf.mxu0
      %v576 = vadd.f32 0.0, %v575
      %v577 = vpop.f32.mrf.mxu0
      %578 = vmatprep.mubr.f32.mxu0 0.0
      %579 = vmatmul.mubr.f32.gmra.mxu0 %v437
      %v580 = vpop.f32.mrf.mxu0
      %v581 = vadd.f32 0.0, %v580
      %v582 = vpop.f32.mrf.mxu0
      %583 = vdwg.mxu0
      %vm584 = vcmask 130048
      %v586 = vsel %vm584, %v355, 0
      %v589 = vsel %vm584, %v356, 0
      %v592 = vsel %vm584, %v357, 0
      %v595 = vsel %vm584, %v358, 0
      %v598 = vsel %vm584, %v359, 0
      %v601 = vsel %vm584, %v360, 0
      %v604 = vsel %vm584, %v361, 0
      %v607 = vsel %vm584, %v362, 0
      %v610 = vsel %vm584, %v363, 0
      %v613 = vsel %vm584, %v364, 0
      %v616 = vsel %vm584, %v365, 0
      %v619 = vsel %vm584, %v366, 0
      %v622 = vsel %vm584, %v367, 0
      %v625 = vsel %vm584, %v368, 0
      %v628 = vsel %vm584, %v369, 0
      %v631 = vsel %vm584, %v370, 0
      %633 = vmatprep.subr.mxu0 0.0
      %634 = vmatpush1.msra.mxu0 0.0
      %635 = vmatprep.subr.mxu0 0.0
      %636 = vmatpush1.msra.mxu0 0.0
      %637 = vmatprep.subr.mxu0 0.0
      %638 = vmatpush1.msra.mxu0 0.0
      %639 = vmatprep.subr.mxu0 0.0
      %640 = vmatpush1.msra.mxu0 0.0
      %641 = vmatprep.subr.mxu0 0.0
      %642 = vmatpush1.msra.mxu0 0.0
      %643 = vmatprep.subr.mxu0 0.0
      %644 = vmatpush1.msra.mxu0 0.0
      %645 = vmatprep.subr.mxu0 0.0
      %646 = vmatpush1.msra.mxu0 0.0
      %647 = vmatprep.subr.mxu0 0.0
      %648 = vmatpush1.msra.mxu0 0.0
      %649 = vmatprep.subr.mxu0 0.0
      %650 = vmatpush1.msra.mxu0 0.0
      %651 = vmatprep.subr.mxu0 0.0
      %652 = vmatpush1.msra.mxu0 0.0
      %653 = vmatprep.subr.mxu0 0.0
      %654 = vmatpush1.msra.mxu0 0.0
      %655 = vmatprep.subr.mxu0 0.0
      %656 = vmatpush1.msra.mxu0 0.0
      %657 = vmatprep.subr.mxu0 0.0
      %658 = vmatpush1.msra.mxu0 0.0
      %659 = vmatprep.subr.mxu0 0.0
      %660 = vmatpush1.msra.mxu0 0.0
      %661 = vmatprep.subr.mxu0 0.0
      %662 = vmatpush1.msra.mxu0 %v388
      %663 = vmatprep.subr.mxu0 0.0
      %664 = vmatpush1.msra.mxu0 %v387
      %665 = vmatprep.subr.mxu0 0.0
      %666 = vmatpush2.msra.mxu0 0.0
      %667 = vmatprep.subr.mxu0 0.0
      %668 = vmatpush2.msra.mxu0 0.0
      %669 = vmatprep.subr.mxu0 0.0
      %670 = vmatpush2.msra.mxu0 0.0
      %671 = vmatprep.subr.mxu0 0.0
      %672 = vmatpush2.msra.mxu0 0.0
      %673 = vmatprep.subr.mxu0 0.0
      %674 = vmatpush2.msra.mxu0 0.0
      %675 = vmatprep.subr.mxu0 0.0
      %676 = vmatpush2.msra.mxu0 0.0
      %677 = vmatprep.subr.mxu0 0.0
      %678 = vmatpush2.msra.mxu0 0.0
      %679 = vmatprep.subr.mxu0 0.0
      %680 = vmatpush2.msra.mxu0 0.0
      %681 = vmatprep.subr.mxu0 0.0
      %682 = vmatpush2.msra.mxu0 0.0
      %683 = vmatprep.subr.mxu0 0.0
      %684 = vmatpush2.msra.mxu0 0.0
      %685 = vmatprep.subr.mxu0 0.0
      %686 = vmatpush2.msra.mxu0 0.0
      %687 = vmatprep.subr.mxu0 0.0
      %688 = vmatpush2.msra.mxu0 0.0
      %689 = vmatprep.subr.mxu0 0.0
      %690 = vmatpush2.msra.mxu0 0.0
      %691 = vmatprep.subr.mxu0 0.0
      %692 = vmatpush2.msra.mxu0 0.0
      %693 = vmatprep.subr.mxu0 0.0
      %694 = vmatpush2.msra.mxu0 0.0
      %695 = vmatprep.subr.mxu0 0.0
      %696 = vmatpush2.msra.mxu0 0.0
      %697 = vmatprep.mubr.f32.mxu0 0.0
      %698 = vmatmul.mubr.f32.gmra.mxu0 %v586
      %v699 = vpop.f32.mrf.mxu0
      %v700 = vadd.f32 %v506, %v699
      %v701 = vpop.f32.mrf.mxu0
      %702 = vmatprep.mubr.f32.mxu0 0.0
      %703 = vmatmul.mubr.f32.gmra.mxu0 %v589
      %v704 = vpop.f32.mrf.mxu0
      %v705 = vadd.f32 %v511, %v704
      %v706 = vpop.f32.mrf.mxu0
      %707 = vmatprep.mubr.f32.mxu0 0.0
      %708 = vmatmul.mubr.f32.gmra.mxu0 %v592
      %v709 = vpop.f32.mrf.mxu0
      %v710 = vadd.f32 %v516, %v709
      %v711 = vpop.f32.mrf.mxu0
      %712 = vmatprep.mubr.f32.mxu0 0.0
      %713 = vmatmul.mubr.f32.gmra.mxu0 %v595
      %v714 = vpop.f32.mrf.mxu0
      %v715 = vadd.f32 %v521, %v714
      %v716 = vpop.f32.mrf.mxu0
      %717 = vmatprep.mubr.f32.mxu0 0.0
      %718 = vmatmul.mubr.f32.gmra.mxu0 %v598
      %v719 = vpop.f32.mrf.mxu0
      %v720 = vadd.f32 %v526, %v719
      %v721 = vpop.f32.mrf.mxu0
      %722 = vmatprep.mubr.f32.mxu0 0.0
      %723 = vmatmul.mubr.f32.gmra.mxu0 %v601
      %v724 = vpop.f32.mrf.mxu0
      %v725 = vadd.f32 %v531, %v724
      %v726 = vpop.f32.mrf.mxu0
      %727 = vmatprep.mubr.f32.mxu0 0.0
      %728 = vmatmul.mubr.f32.gmra.mxu0 %v604
      %v729 = vpop.f32.mrf.mxu0
      %v730 = vadd.f32 %v536, %v729
      %v731 = vpop.f32.mrf.mxu0
      %732 = vmatprep.mubr.f32.mxu0 0.0
      %733 = vmatmul.mubr.f32.gmra.mxu0 %v607
      %v734 = vpop.f32.mrf.mxu0
      %v735 = vadd.f32 %v541, %v734
      %v736 = vpop.f32.mrf.mxu0
      %737 = vmatprep.mubr.f32.mxu0 0.0
      %738 = vmatmul.mubr.f32.gmra.mxu0 %v610
      %v739 = vpop.f32.mrf.mxu0
      %v740 = vadd.f32 %v546, %v739
      %v741 = vpop.f32.mrf.mxu0
      %742 = vmatprep.mubr.f32.mxu0 0.0
      %743 = vmatmul.mubr.f32.gmra.mxu0 %v613
      %v744 = vpop.f32.mrf.mxu0
      %v745 = vadd.f32 %v551, %v744
      %v746 = vpop.f32.mrf.mxu0
      %747 = vmatprep.mubr.f32.mxu0 0.0
      %748 = vmatmul.mubr.f32.gmra.mxu0 %v616
      %v749 = vpop.f32.mrf.mxu0
      %v750 = vadd.f32 %v556, %v749
      %v751 = vpop.f32.mrf.mxu0
      %752 = vmatprep.mubr.f32.mxu0 0.0
      %753 = vmatmul.mubr.f32.gmra.mxu0 %v619
      %v754 = vpop.f32.mrf.mxu0
      %v755 = vadd.f32 %v561, %v754
      %v756 = vpop.f32.mrf.mxu0
      %757 = vmatprep.mubr.f32.mxu0 0.0
      %758 = vmatmul.mubr.f32.gmra.mxu0 %v622
      %v759 = vpop.f32.mrf.mxu0
      %v760 = vadd.f32 %v566, %v759
      %v761 = vpop.f32.mrf.mxu0
      %762 = vmatprep.mubr.f32.mxu0 0.0
      %763 = vmatmul.mubr.f32.gmra.mxu0 %v625
      %v764 = vpop.f32.mrf.mxu0
      %v765 = vadd.f32 %v571, %v764
      %v766 = vpop.f32.mrf.mxu0
      %767 = vmatprep.mubr.f32.mxu0 0.0
      %768 = vmatmul.mubr.f32.gmra.mxu0 %v628
      %v769 = vpop.f32.mrf.mxu0
      %v770 = vadd.f32 %v576, %v769
      %v771 = vpop.f32.mrf.mxu0
      %772 = vmatprep.mubr.f32.mxu0 0.0
      %773 = vmatmul.mubr.f32.gmra.mxu0 %v631
      %v774 = vpop.f32.mrf.mxu0
      %v775 = vadd.f32 %v581, %v774
      %v776 = vpop.f32.mrf.mxu0
      %777 = vdwg.mxu0
      %v778 = vld [vmem:[%s4] sm:$0x1]
      %v780 = vlaneseq
      %v781 = vshrl.u32 %v780, 7
      %v782 = vsub.s32 0, %v781
      %v783 = vrot.slane %v778, %v782
      %v785 = vadd.f32 %v700, %v783
      %v786 = vadd.f32 %v705, %v783
      %v787 = vadd.f32 %v710, %v783
      %v788 = vadd.f32 %v715, %v783
      %v789 = vadd.f32 %v720, %v783
      %v790 = vadd.f32 %v725, %v783
      %v791 = vadd.f32 %v730, %v783
      %v792 = vadd.f32 %v735, %v783
      %v793 = vadd.f32 %v740, %v783
      %v794 = vadd.f32 %v745, %v783
      %v795 = vadd.f32 %v750, %v783
      %v796 = vadd.f32 %v755, %v783
      %v797 = vadd.f32 %v760, %v783
      %v798 = vadd.f32 %v765, %v783
      %v799 = vadd.f32 %v770, %v783
      %v800 = vadd.f32 %v775, %v783
      %v801 = vmax.f32 %v785, 0.0
      %v802 = vmax.f32 %v786, 0.0
      %v803 = vmax.f32 %v787, 0.0
      %v804 = vmax.f32 %v788, 0.0
      %v805 = vmax.f32 %v789, 0.0
      %v806 = vmax.f32 %v790, 0.0
      %v807 = vmax.f32 %v791, 0.0
      %v808 = vmax.f32 %v792, 0.0
      %v809 = vmax.f32 %v793, 0.0
      %v810 = vmax.f32 %v794, 0.0
      %v811 = vmax.f32 %v795, 0.0
      %v812 = vmax.f32 %v796, 0.0
      %v813 = vmax.f32 %v797, 0.0
      %v814 = vmax.f32 %v798, 0.0
      %v815 = vmax.f32 %v799, 0.0
      %v816 = vmax.f32 %v800, 0.0
      %v817 = vld [vmem:[%s5] sm:$0xff]
      %v818 = vld [vmem:[%s5 + $0x8] sm:$0xff]
      %v819 = vld [vmem:[%s5 + $0x10] sm:$0xff]
      %v820 = vld [vmem:[%s5 + $0x18] sm:$0xff]
      %v821 = vld [vmem:[%s6] sm:$0x1]
      %v823 = vlaneseq
      %v824 = vshrl.u32 %v823, 7
      %v825 = vsub.s32 0, %v824
      %v826 = vrot.slane %v821, %v825
      %vm828 = vcmask 261120
      %v830 = vsel %vm828, %v801, 0
      %v833 = vsel %vm828, %v802, 0
      %v836 = vsel %vm828, %v803, 0
      %v839 = vsel %vm828, %v804, 0
      %v842 = vsel %vm828, %v805, 0
      %v845 = vsel %vm828, %v806, 0
      %v848 = vsel %vm828, %v807, 0
      %v851 = vsel %vm828, %v808, 0
      %v854 = vsel %vm828, %v809, 0
      %v857 = vsel %vm828, %v810, 0
      %v860 = vsel %vm828, %v811, 0
      %v863 = vsel %vm828, %v812, 0
      %v866 = vsel %vm828, %v813, 0
      %v869 = vsel %vm828, %v814, 0
      %v872 = vsel %vm828, %v815, 0
      %v875 = vsel %vm828, %v816, 0
      %877 = vmatprep.subr.mxu0 0.0
      %878 = vmatpush1.msra.mxu0 0.0
      %879 = vmatprep.subr.mxu0 0.0
      %880 = vmatpush1.msra.mxu0 0.0
      %881 = vmatprep.subr.mxu0 0.0
      %882 = vmatpush1.msra.mxu0 0.0
      %883 = vmatprep.subr.mxu0 0.0
      %884 = vmatpush1.msra.mxu0 0.0
      %885 = vmatprep.subr.mxu0 0.0
      %886 = vmatpush1.msra.mxu0 0.0
      %887 = vmatprep.subr.mxu0 0.0
      %888 = vmatpush1.msra.mxu0 0.0
      %889 = vmatprep.subr.mxu0 0.0
      %890 = vmatpush1.msra.mxu0 0.0
      %891 = vmatprep.subr.mxu0 0.0
      %892 = vmatpush1.msra.mxu0 0.0
      %893 = vmatprep.subr.mxu0 0.0
      %894 = vmatpush1.msra.mxu0 0.0
      %895 = vmatprep.subr.mxu0 0.0
      %896 = vmatpush1.msra.mxu0 0.0
      %897 = vmatprep.subr.mxu0 0.0
      %898 = vmatpush1.msra.mxu0 0.0
      %899 = vmatprep.subr.mxu0 0.0
      %900 = vmatpush1.msra.mxu0 0.0
      %901 = vmatprep.subr.mxu0 0.0
      %902 = vmatpush1.msra.mxu0 %v820
      %903 = vmatprep.subr.mxu0 0.0
      %904 = vmatpush1.msra.mxu0 %v819
      %905 = vmatprep.subr.mxu0 0.0
      %906 = vmatpush1.msra.mxu0 %v818
      %907 = vmatprep.subr.mxu0 0.0
      %908 = vmatpush1.msra.mxu0 %v817
      %909 = vmatprep.subr.mxu0 0.0
      %910 = vmatpush2.msra.mxu0 0.0
      %911 = vmatprep.subr.mxu0 0.0
      %912 = vmatpush2.msra.mxu0 0.0
      %913 = vmatprep.subr.mxu0 0.0
      %914 = vmatpush2.msra.mxu0 0.0
      %915 = vmatprep.subr.mxu0 0.0
      %916 = vmatpush2.msra.mxu0 0.0
      %917 = vmatprep.subr.mxu0 0.0
      %918 = vmatpush2.msra.mxu0 0.0
      %919 = vmatprep.subr.mxu0 0.0
      %920 = vmatpush2.msra.mxu0 0.0
      %921 = vmatprep.subr.mxu0 0.0
      %922 = vmatpush2.msra.mxu0 0.0
      %923 = vmatprep.subr.mxu0 0.0
      %924 = vmatpush2.msra.mxu0 0.0
      %925 = vmatprep.subr.mxu0 0.0
      %926 = vmatpush2.msra.mxu0 0.0
      %927 = vmatprep.subr.mxu0 0.0
      %928 = vmatpush2.msra.mxu0 0.0
      %929 = vmatprep.subr.mxu0 0.0
      %930 = vmatpush2.msra.mxu0 0.0
      %931 = vmatprep.subr.mxu0 0.0
      %932 = vmatpush2.msra.mxu0 0.0
      %933 = vmatprep.subr.mxu0 0.0
      %934 = vmatpush2.msra.mxu0 0.0
      %935 = vmatprep.subr.mxu0 0.0
      %936 = vmatpush2.msra.mxu0 0.0
      %937 = vmatprep.subr.mxu0 0.0
      %938 = vmatpush2.msra.mxu0 0.0
      %939 = vmatprep.subr.mxu0 0.0
      %940 = vmatpush2.msra.mxu0 0.0
      %941 = vmatprep.mubr.f32.mxu0 0.0
      %942 = vmatmul.mubr.f32.gmra.mxu0 %v830
      %v943 = vpop.f32.mrf.mxu0
      %v944 = vadd.f32 %v826, %v943
      %v945 = vpop.f32.mrf.mxu0
      %946 = vmatprep.mubr.f32.mxu0 0.0
      %947 = vmatmul.mubr.f32.gmra.mxu0 %v833
      %v948 = vpop.f32.mrf.mxu0
      %v949 = vadd.f32 %v826, %v948
      %v950 = vpop.f32.mrf.mxu0
      %951 = vmatprep.mubr.f32.mxu0 0.0
      %952 = vmatmul.mubr.f32.gmra.mxu0 %v836
      %v953 = vpop.f32.mrf.mxu0
      %v954 = vadd.f32 %v826, %v953
      %v955 = vpop.f32.mrf.mxu0
      %956 = vmatprep.mubr.f32.mxu0 0.0
      %957 = vmatmul.mubr.f32.gmra.mxu0 %v839
      %v958 = vpop.f32.mrf.mxu0
      %v959 = vadd.f32 %v826, %v958
      %v960 = vpop.f32.mrf.mxu0
      %961 = vmatprep.mubr.f32.mxu0 0.0
      %962 = vmatmul.mubr.f32.gmra.mxu0 %v842
      %v963 = vpop.f32.mrf.mxu0
      %v964 = vadd.f32 %v826, %v963
      %v965 = vpop.f32.mrf.mxu0
      %966 = vmatprep.mubr.f32.mxu0 0.0
      %967 = vmatmul.mubr.f32.gmra.mxu0 %v845
      %v968 = vpop.f32.mrf.mxu0
      %v969 = vadd.f32 %v826, %v968
      %v970 = vpop.f32.mrf.mxu0
      %971 = vmatprep.mubr.f32.mxu0 0.0
      %972 = vmatmul.mubr.f32.gmra.mxu0 %v848
      %v973 = vpop.f32.mrf.mxu0
      %v974 = vadd.f32 %v826, %v973
      %v975 = vpop.f32.mrf.mxu0
      %976 = vmatprep.mubr.f32.mxu0 0.0
      %977 = vmatmul.mubr.f32.gmra.mxu0 %v851
      %v978 = vpop.f32.mrf.mxu0
      %v979 = vadd.f32 %v826, %v978
      %v980 = vpop.f32.mrf.mxu0
      %981 = vmatprep.mubr.f32.mxu0 0.0
      %982 = vmatmul.mubr.f32.gmra.mxu0 %v854
      %v983 = vpop.f32.mrf.mxu0
      %v984 = vadd.f32 %v826, %v983
      %v985 = vpop.f32.mrf.mxu0
      %986 = vmatprep.mubr.f32.mxu0 0.0
      %987 = vmatmul.mubr.f32.gmra.mxu0 %v857
      %v988 = vpop.f32.mrf.mxu0
      %v989 = vadd.f32 %v826, %v988
      %v990 = vpop.f32.mrf.mxu0
      %991 = vmatprep.mubr.f32.mxu0 0.0
      %992 = vmatmul.mubr.f32.gmra.mxu0 %v860
      %v993 = vpop.f32.mrf.mxu0
      %v994 = vadd.f32 %v826, %v993
      %v995 = vpop.f32.mrf.mxu0
      %996 = vmatprep.mubr.f32.mxu0 0.0
      %997 = vmatmul.mubr.f32.gmra.mxu0 %v863
      %v998 = vpop.f32.mrf.mxu0
      %v999 = vadd.f32 %v826, %v998
      %v1000 = vpop.f32.mrf.mxu0
      %1001 = vmatprep.mubr.f32.mxu0 0.0
      %1002 = vmatmul.mubr.f32.gmra.mxu0 %v866
      %v1003 = vpop.f32.mrf.mxu0
      %v1004 = vadd.f32 %v826, %v1003
      %v1005 = vpop.f32.mrf.mxu0
      %1006 = vmatprep.mubr.f32.mxu0 0.0
      %1007 = vmatmul.mubr.f32.gmra.mxu0 %v869
      %v1008 = vpop.f32.mrf.mxu0
      %v1009 = vadd.f32 %v826, %v1008
      %v1010 = vpop.f32.mrf.mxu0
      %1011 = vmatprep.mubr.f32.mxu0 0.0
      %1012 = vmatmul.mubr.f32.gmra.mxu0 %v872
      %v1013 = vpop.f32.mrf.mxu0
      %v1014 = vadd.f32 %v826, %v1013
      %v1015 = vpop.f32.mrf.mxu0
      %1016 = vmatprep.mubr.f32.mxu0 0.0
      %1017 = vmatmul.mubr.f32.gmra.mxu0 %v875
      %v1018 = vpop.f32.mrf.mxu0
      %v1019 = vadd.f32 %v826, %v1018
      %v1020 = vpop.f32.mrf.mxu0
      %1021 = vdwg.mxu0
      %v1022 = vmax.f32 %v944, 0.0
      %v1023 = vmax.f32 %v949, 0.0
      %v1024 = vmax.f32 %v954, 0.0
      %v1025 = vmax.f32 %v959, 0.0
      %v1026 = vmax.f32 %v964, 0.0
      %v1027 = vmax.f32 %v969, 0.0
      %v1028 = vmax.f32 %v974, 0.0
      %v1029 = vmax.f32 %v979, 0.0
      %v1030 = vmax.f32 %v984, 0.0
      %v1031 = vmax.f32 %v989, 0.0
      %v1032 = vmax.f32 %v994, 0.0
      %v1033 = vmax.f32 %v999, 0.0
      %v1034 = vmax.f32 %v1004, 0.0
      %v1035 = vmax.f32 %v1009, 0.0
      %v1036 = vmax.f32 %v1014, 0.0
      %v1037 = vmax.f32 %v1019, 0.0
      %v1038 = vld [vmem:[%s7] sm:$0x1]
      %v1039 = vld [vmem:[#allocation2] sm:$0x1]
      %1041 = vset.pattern.permute.xlu0 0
      %1042 = vperm.xlu0 %1041, %v1039
      %v1043 = vpop.permute.xlu0 %1042
      %v1045 = vlaneseq
      %v1046 = vshrl.u32 %v1045, 7
      %v1047 = vsub.s32 0, %v1046
      %v1048 = vrot.slane %v1043, %v1047
      %v1050 = vsel %vm828, %v1038, 0
      %v1053 = vsel %vm828, %v1022, 0
      %v1056 = vsel %vm828, %v1023, 0
      %v1059 = vsel %vm828, %v1024, 0
      %v1062 = vsel %vm828, %v1025, 0
      %v1065 = vsel %vm828, %v1026, 0
      %v1068 = vsel %vm828, %v1027, 0
      %v1071 = vsel %vm828, %v1028, 0
      %v1074 = vsel %vm828, %v1029, 0
      %v1077 = vsel %vm828, %v1030, 0
      %v1080 = vsel %vm828, %v1031, 0
      %v1083 = vsel %vm828, %v1032, 0
      %v1086 = vsel %vm828, %v1033, 0
      %v1089 = vsel %vm828, %v1034, 0
      %v1092 = vsel %vm828, %v1035, 0
      %v1095 = vsel %vm828, %v1036, 0
      %v1098 = vsel %vm828, %v1037, 0
      %1100 = vmatprep.subr.mxu0 0.0
      %1101 = vmatpush1.xpose.msra.mxu0 %v1098
      %1102 = vmatprep.subr.mxu0 0.0
      %1103 = vmatpush1.xpose.msra.mxu0 %v1095
      %1104 = vmatprep.subr.mxu0 0.0
      %1105 = vmatpush1.xpose.msra.mxu0 %v1092
      %1106 = vmatprep.subr.mxu0 0.0
      %1107 = vmatpush1.xpose.msra.mxu0 %v1089
      %1108 = vmatprep.subr.mxu0 0.0
      %1109 = vmatpush1.xpose.msra.mxu0 %v1086
      %1110 = vmatprep.subr.mxu0 0.0
      %1111 = vmatpush1.xpose.msra.mxu0 %v1083
      %1112 = vmatprep.subr.mxu0 0.0
      %1113 = vmatpush1.xpose.msra.mxu0 %v1080
      %1114 = vmatprep.subr.mxu0 0.0
      %1115 = vmatpush1.xpose.msra.mxu0 %v1077
      %1116 = vmatprep.subr.mxu0 0.0
      %1117 = vmatpush1.xpose.msra.mxu0 %v1074
      %1118 = vmatprep.subr.mxu0 0.0
      %1119 = vmatpush1.xpose.msra.mxu0 %v1071
      %1120 = vmatprep.subr.mxu0 0.0
      %1121 = vmatpush1.xpose.msra.mxu0 %v1068
      %1122 = vmatprep.subr.mxu0 0.0
      %1123 = vmatpush1.xpose.msra.mxu0 %v1065
      %1124 = vmatprep.subr.mxu0 0.0
      %1125 = vmatpush1.xpose.msra.mxu0 %v1062
      %1126 = vmatprep.subr.mxu0 0.0
      %1127 = vmatpush1.xpose.msra.mxu0 %v1059
      %1128 = vmatprep.subr.mxu0 0.0
      %1129 = vmatpush1.xpose.msra.mxu0 %v1056
      %1130 = vmatprep.subr.mxu0 0.0
      %1131 = vmatpush1.xpose.msra.mxu0 %v1053
      %1132 = vmatprep.subr.mxu0 0.0
      %1133 = vmatpush2.xpose.msra.mxu0 0.0
      %1134 = vmatprep.subr.mxu0 0.0
      %1135 = vmatpush2.xpose.msra.mxu0 0.0
      %1136 = vmatprep.subr.mxu0 0.0
      %1137 = vmatpush2.xpose.msra.mxu0 0.0
      %1138 = vmatprep.subr.mxu0 0.0
      %1139 = vmatpush2.xpose.msra.mxu0 0.0
      %1140 = vmatprep.subr.mxu0 0.0
      %1141 = vmatpush2.xpose.msra.mxu0 0.0
      %1142 = vmatprep.subr.mxu0 0.0
      %1143 = vmatpush2.xpose.msra.mxu0 0.0
      %1144 = vmatprep.subr.mxu0 0.0
      %1145 = vmatpush2.xpose.msra.mxu0 0.0
      %1146 = vmatprep.subr.mxu0 0.0
      %1147 = vmatpush2.xpose.msra.mxu0 0.0
      %1148 = vmatprep.subr.mxu0 0.0
      %1149 = vmatpush2.xpose.msra.mxu0 0.0
      %1150 = vmatprep.subr.mxu0 0.0
      %1151 = vmatpush2.xpose.msra.mxu0 0.0
      %1152 = vmatprep.subr.mxu0 0.0
      %1153 = vmatpush2.xpose.msra.mxu0 0.0
      %1154 = vmatprep.subr.mxu0 0.0
      %1155 = vmatpush2.xpose.msra.mxu0 0.0
      %1156 = vmatprep.subr.mxu0 0.0
      %1157 = vmatpush2.xpose.msra.mxu0 0.0
      %1158 = vmatprep.subr.mxu0 0.0
      %1159 = vmatpush2.xpose.msra.mxu0 0.0
      %1160 = vmatprep.subr.mxu0 0.0
      %1161 = vmatpush2.xpose.msra.mxu0 0.0
      %1162 = vmatprep.subr.mxu0 0.0
      %1163 = vmatpush2.xpose.msra.mxu0 0.0
      %1164 = vmatprep.mubr.f32.mxu0 0.0
      %1165 = vmatmul.mubr.f32.gmra.mxu0 %v1050
      %v1166 = vpop.f32.mrf.mxu0
      %v1167 = vadd.f32 %v1048, %v1166
      %v1168 = vpop.f32.mrf.mxu0
      %1169 = vdwg.mxu0
      %1170 = vst [vmem:[%s354] sm:$0x1] %v1167
      %p1171 = scmp.lt.s32.totalorder %s22, 1
      %s1172 = scalar_select %p1171, %s22, 1
      %s1173 = scalar_lea.vmem %s9, %s1172
      // Predicated region
      $region57: #{qfunction_forward.1} parent=55 // pred_check
        %p1174 = pneg %p239
      $region58: #{qfunction_forward.1} parent=55 // pred_check_branch
        %1176 = sbr.rel (%p1174) target = $region60
      $region59: #{qfunction_forward.1} parent=55 // pred_region
        _
      $region60: #{qfunction_forward.1} parent=55 // pred_fallthru
        _
    $region56: #{qfunction_forward.1} parent=5 // pred_fallthru
      _
    %p1177 = scmp.le.s32.totalorder 2, %s17
    // Predicated region
    $region61: #{qfunction_forward.1} parent=5 // pred_check
      %p1178 = pneg %p1177
    $region62: #{qfunction_forward.1} parent=5 // pred_check_branch
      %1180 = sbr.rel (%p1178) target = $region64
    $region63: #{qfunction_forward.1} parent=5 // pred_region
      %s1181 = ssub.s32 %s17, 2
      // Predicated region
      $region65: #{qfunction_forward.1} parent=63 // pred_check
        %p1182 = pneg %p245
      $region66: #{qfunction_forward.1} parent=63 // pred_check_branch
        %1184 = sbr.rel (%p1182) target = $region68
      $region67: #{qfunction_forward.1} parent=63 // pred_region
        %p1185 = scmp.lt.s32.totalorder %s23, 1
        %s1186 = scalar_select %p1185, %s23, 1
        %s1187 = scalar_lea.vmem %s9, %s1186
      $region68: #{qfunction_forward.1} parent=63 // pred_fallthru
        _
    $region64: #{qfunction_forward.1} parent=5 // pred_fallthru
      _
  $region6: #{qfunction_forward.1} parent=0 // loop_footer
    %s21 = sadd.s32 1, %s17
  $region7: #{qfunction_forward.1} parent=0 // loop_footer_branch
    %16 = sbr.rel target = $region3
  $region8: #{qfunction_forward.1} parent=0 // loop_exit
    _

</llo_original>
